<compile_context>
chip_gen: v7x
topology: tpu7x:2x2x1
jax: 0.10.0
libtpu: 0.0.40
codegen_flags: <defaults>
</compile_context>

<pallas_src>
import jax
import jax.numpy as jnp
from jax import lax
from jax.experimental import pallas as pl
from jax.experimental.pallas import tpu as pltpu


def _round_up(x: int, m: int) -> int:
    return ((x + m - 1) // m) * m


def actor_mlp_kernel(x_ref, w1_ref, b1_ref, w2_ref, b2_ref, w3_ref, b3_ref, o_ref):
    # One batch-tile per grid step; the whole 3-layer MLP hot path runs in-kernel.
    cdt = w1_ref.dtype  # MXU operand dtype (f32, or bf16 if param_dtype=bf16)

    x = x_ref[...].astype(cdt)  # (tile, state_dim); no-op cast in the f32 path

    # Linear 1 + ReLU   (bias add / ReLU in f32)
    h = jnp.dot(x, w1_ref[...], preferred_element_type=jnp.float32) + b1_ref[...]
    h = jnp.maximum(h, 0.0)

    # Linear 2 + ReLU
    h = jnp.dot(h.astype(cdt), w2_ref[...], preferred_element_type=jnp.float32) + b2_ref[...]
    h = jnp.maximum(h, 0.0)

    # Linear 3 (build_mlp deletes the trailing activation), then tanh (EUP)
    a = jnp.dot(h.astype(cdt), w3_ref[...], preferred_element_type=jnp.float32) + b3_ref[...]
    o_ref[...] = jnp.tanh(a).astype(o_ref.dtype)


def _choose_tile(B: int, batch_tile: int) -> int:
    """Pick the per-step batch tile (rows).

    - B < 8: use the full batch (block dim equal to the array dim is legal).
    - small B: one 8-row-rounded step.
    - otherwise: split into >=2 grid steps (both v7x TensorCores get work via the
      "parallel" batch axis), capped at batch_tile rows per step.
    """
    if B < 8:
        return B
    if B <= 16:
        return _round_up(B, 8)
    return min(batch_tile, _round_up((B + 1) // 2, 8))


def actor_forward(state, params, *, batch_tile=2048, param_dtype=None):
    """state: (B, state_dim) f32. params: (w1,b1,w2,b2,w3,b3), w_i (in,out), b_i (1,out).

    batch_tile=2048 keeps the per-step x stream large enough to sit near the HBM roofline
    on v5e/v6e/v7x while using <1 MiB of VMEM. param_dtype=jnp.bfloat16 halves weight
    storage and runs native bf16 MXU passes (f32 accumulation is kept).
    """
    w1, b1, w2, b2, w3, b3 = params
    if param_dtype is not None:
        w1, w2, w3 = (w.astype(param_dtype) for w in (w1, w2, w3))

    B, state_dim = state.shape
    action_dim = w3.shape[1]

    tile = _choose_tile(B, batch_tile)
    grid = pl.cdiv(B, tile)  # partial last block: OOB reads only feed dropped OOB stores

    # Whole-array, grid-invariant VMEM residents for weights/biases (copied in once).
    vmem_full = pl.BlockSpec(memory_space=pltpu.MemorySpace.VMEM)

    out = pl.pallas_call(
        actor_mlp_kernel,
        out_shape=jax.ShapeDtypeStruct((B, action_dim), state.dtype),
        grid=(grid,),
        in_specs=[
            # Last dim == full array dim (state_dim), so no 128-lane padding is needed.
            pl.BlockSpec((tile, state_dim), lambda i: (i, 0)),
            vmem_full, vmem_full,   # w1, b1
            vmem_full, vmem_full,   # w2, b2
            vmem_full, vmem_full,   # w3, b3
        ],
        # Output last dim == full array dim (action_dim): 16x less HBM writeback than
        # padding the action dim to 128, and no wrapper-side slice pass.
        out_specs=pl.BlockSpec((tile, action_dim), lambda i: (i, 0)),
        compiler_params=pltpu.CompilerParams(
            dimension_semantics=("parallel",),
        ),
    )(state, w1, b1, w2, b2, w3, b3)
    return out


def init_actor_params(key, state_dim, dims, action_dim):
    """Deterministic init mirroring nn.Linear shapes; weights stored (in, out)."""
    layer_dims = [state_dim, *dims, action_dim]
    params = []
    for i in range(len(layer_dims) - 1):
        fan_in, fan_out = layer_dims[i], layer_dims[i + 1]
        key, kw, kb = jax.random.split(key, 3)
        bound = 1.0 / jnp.sqrt(jnp.float32(fan_in))
        w = jax.random.uniform(kw, (fan_in, fan_out), jnp.float32, -bound, bound)
        b = jax.random.uniform(kb, (1, fan_out), jnp.float32, -bound, bound)
        params.extend([w, b])
    return tuple(params)


def actor_reference(state, params):
    w1, b1, w2, b2, w3, b3 = params
    hp = lax.Precision.HIGHEST  # match the kernel's f32 MXU accumulation
    h = jnp.maximum(jnp.dot(state, w1, precision=hp) + b1, 0.0)
    h = jnp.maximum(jnp.dot(h, w2, precision=hp) + b2, 0.0)
    return jnp.tanh(jnp.dot(h, w3, precision=hp) + b3)


if __name__ == "__main__":
    # Small shapes consistent with Actor(dims=[32, 32], state_dim=16, action_dim=8)
    batch, state_dim, dims, action_dim = 8, 16, [32, 32], 8

    key = jax.random.PRNGKey(0)
    key, kx = jax.random.split(key)
    state = jax.random.normal(kx, (batch, state_dim), jnp.float32)

    params = init_actor_params(key, state_dim, dims, action_dim)

    out = jax.block_until_ready(actor_forward(state, params))
    ref = actor_reference(state, params)
    assert out.shape == (batch, action_dim)
    assert jnp.allclose(out, ref, atol=1e-4, rtol=1e-4)

    # Tiled path: B > 16, non-multiple of the chosen tile -> 2 grid steps with a partial
    # last block (exercises the OOB-read / dropped-store path).
    key, kx2 = jax.random.split(key)
    big_state = jax.random.normal(kx2, (600, state_dim), jnp.float32)
    big_ref = actor_reference(big_state, params)
    big_out = jax.block_until_ready(actor_forward(big_state, params))
    assert big_out.shape == (600, action_dim)
    assert jnp.allclose(big_out, big_ref, atol=1e-4, rtol=1e-4)

    # Optional bf16 weight storage (native bf16 MXU passes, f32 accumulation).
    bf16_out = jax.block_until_ready(
        actor_forward(big_state, params, param_dtype=jnp.bfloat16))
    assert bf16_out.shape == (600, action_dim)
    assert jnp.allclose(bf16_out, big_ref, atol=5e-2)

    # TODO(synk): get_action's Normal sampling + clip is stochastic glue, not a kernel
    # hot path; only forward() is implemented in Pallas.
    print("KERNEL_OK")
</pallas_src>

<mosaic_0001>
module attributes {stable_mosaic.version = 11 : i64} {
  func.func @actor_mlp_kernel(%arg0: i32, %arg1: memref<8x16xf32, #tpu.memory_space<vmem>>, %arg2: memref<16x32xf32, #tpu.memory_space<vmem>>, %arg3: memref<1x32xf32, #tpu.memory_space<vmem>>, %arg4: memref<32x32xf32, #tpu.memory_space<vmem>>, %arg5: memref<1x32xf32, #tpu.memory_space<vmem>>, %arg6: memref<32x8xf32, #tpu.memory_space<vmem>>, %arg7: memref<1x8xf32, #tpu.memory_space<vmem>>, %arg8: memref<8x8xf32, #tpu.memory_space<vmem>>) attributes {dimension_semantics = [#tpu.dimension_semantics<parallel>], iteration_bounds = array<i64: 1>, scalar_prefetch = 0 : i64, scratch_operands = 0 : i64, tpu.core_type = #tpu.core_type<tc>, window_params = [{transform_indices = @transform_0, window_bounds = array<i64: 8, 16>}, {pipeline_mode = #tpu.pipeline_mode<synchronous>, transform_indices = @transform_1, window_bounds = array<i64: 16, 32>}, {pipeline_mode = #tpu.pipeline_mode<synchronous>, transform_indices = @transform_2, window_bounds = array<i64: 1, 32>}, {pipeline_mode = #tpu.pipeline_mode<synchronous>, transform_indices = @transform_3, window_bounds = array<i64: 32, 32>}, {pipeline_mode = #tpu.pipeline_mode<synchronous>, transform_indices = @transform_4, window_bounds = array<i64: 1, 32>}, {pipeline_mode = #tpu.pipeline_mode<synchronous>, transform_indices = @transform_5, window_bounds = array<i64: 32, 8>}, {pipeline_mode = #tpu.pipeline_mode<synchronous>, transform_indices = @transform_6, window_bounds = array<i64: 1, 8>}, {transform_indices = @transform_7, window_bounds = array<i64: 8, 8>}]} {
    %c0 = arith.constant 0 : index
    %c0_0 = arith.constant 0 : index
    %0 = vector.load %arg1[%c0, %c0_0] : memref<8x16xf32, #tpu.memory_space<vmem>>, vector<8x16xf32>
    %c0_1 = arith.constant 0 : index
    %c0_2 = arith.constant 0 : index
    %1 = vector.load %arg2[%c0_1, %c0_2] : memref<16x32xf32, #tpu.memory_space<vmem>>, vector<16x32xf32>
    %cst = arith.constant dense<0.000000e+00> : vector<8x32xf32>
    %2 = tpu.matmul %0, %1, %cst {dimension_numbers = #tpu.dot_dimension_numbers<[1], [0], [0], [1], [0, 0, 1, 1], [], []>} : vector<8x16xf32>, vector<16x32xf32>, vector<8x32xf32> -> vector<8x32xf32>
    %c0_3 = arith.constant 0 : index
    %c0_4 = arith.constant 0 : index
    %3 = vector.load %arg3[%c0_3, %c0_4] : memref<1x32xf32, #tpu.memory_space<vmem>>, vector<1x32xf32>
    %4 = vector.broadcast %3 : vector<1x32xf32> to vector<8x32xf32>
    %5 = arith.addf %2, %4 : vector<8x32xf32>
    %cst_5 = arith.constant 0.000000e+00 : f32
    %6 = vector.broadcast %cst_5 : f32 to vector<8x32xf32>
    %7 = arith.maximumf %5, %6 : vector<8x32xf32>
    %c0_6 = arith.constant 0 : index
    %c0_7 = arith.constant 0 : index
    %8 = vector.load %arg4[%c0_6, %c0_7] : memref<32x32xf32, #tpu.memory_space<vmem>>, vector<32x32xf32>
    %cst_8 = arith.constant dense<0.000000e+00> : vector<8x32xf32>
    %9 = tpu.matmul %7, %8, %cst_8 {dimension_numbers = #tpu.dot_dimension_numbers<[1], [0], [0], [1], [0, 0, 1, 1], [], []>} : vector<8x32xf32>, vector<32x32xf32>, vector<8x32xf32> -> vector<8x32xf32>
    %c0_9 = arith.constant 0 : index
    %c0_10 = arith.constant 0 : index
    %10 = vector.load %arg5[%c0_9, %c0_10] : memref<1x32xf32, #tpu.memory_space<vmem>>, vector<1x32xf32>
    %11 = vector.broadcast %10 : vector<1x32xf32> to vector<8x32xf32>
    %12 = arith.addf %9, %11 : vector<8x32xf32>
    %cst_11 = arith.constant 0.000000e+00 : f32
    %13 = vector.broadcast %cst_11 : f32 to vector<8x32xf32>
    %14 = arith.maximumf %12, %13 : vector<8x32xf32>
    %c0_12 = arith.constant 0 : index
    %c0_13 = arith.constant 0 : index
    %15 = vector.load %arg6[%c0_12, %c0_13] : memref<32x8xf32, #tpu.memory_space<vmem>>, vector<32x8xf32>
    %cst_14 = arith.constant dense<0.000000e+00> : vector<8x8xf32>
    %16 = tpu.matmul %14, %15, %cst_14 {dimension_numbers = #tpu.dot_dimension_numbers<[1], [0], [0], [1], [0, 0, 1, 1], [], []>} : vector<8x32xf32>, vector<32x8xf32>, vector<8x8xf32> -> vector<8x8xf32>
    %c0_15 = arith.constant 0 : index
    %c0_16 = arith.constant 0 : index
    %17 = vector.load %arg7[%c0_15, %c0_16] : memref<1x8xf32, #tpu.memory_space<vmem>>, vector<1x8xf32>
    %18 = vector.broadcast %17 : vector<1x8xf32> to vector<8x8xf32>
    %19 = arith.addf %16, %18 : vector<8x8xf32>
    %20 = math.tanh %19 : vector<8x8xf32>
    %c0_17 = arith.constant 0 : index
    %c0_18 = arith.constant 0 : index
    %21 = vector.load %arg8[%c0_17, %c0_18] : memref<8x8xf32, #tpu.memory_space<vmem>>, vector<8x8xf32>
    tpu.vector_store %arg8[%c0_17, %c0_18], %20 {strides = array<i32>} : memref<8x8xf32, #tpu.memory_space<vmem>>, vector<8x8xf32>,
    return
  }
  func.func @transform_0(%arg0: i32) -> (i32, i32) {
    %c0_i32 = arith.constant 0 : i32
    %c0_i32_0 = arith.constant 0 : i32
    return %arg0, %c0_i32 : i32, i32
  }
  func.func @transform_1(%arg0: i32) -> (i32, i32) {
    %c0_i32 = arith.constant 0 : i32
    %c0_i32_0 = arith.constant 0 : i32
    %c0_i32_1 = arith.constant 0 : i32
    return %c0_i32, %c0_i32_0 : i32, i32
  }
  func.func @transform_2(%arg0: i32) -> (i32, i32) {
    %c0_i32 = arith.constant 0 : i32
    %c0_i32_0 = arith.constant 0 : i32
    %c0_i32_1 = arith.constant 0 : i32
    return %c0_i32, %c0_i32_0 : i32, i32
  }
  func.func @transform_3(%arg0: i32) -> (i32, i32) {
    %c0_i32 = arith.constant 0 : i32
    %c0_i32_0 = arith.constant 0 : i32
    %c0_i32_1 = arith.constant 0 : i32
    return %c0_i32, %c0_i32_0 : i32, i32
  }
  func.func @transform_4(%arg0: i32) -> (i32, i32) {
    %c0_i32 = arith.constant 0 : i32
    %c0_i32_0 = arith.constant 0 : i32
    %c0_i32_1 = arith.constant 0 : i32
    return %c0_i32, %c0_i32_0 : i32, i32
  }
  func.func @transform_5(%arg0: i32) -> (i32, i32) {
    %c0_i32 = arith.constant 0 : i32
    %c0_i32_0 = arith.constant 0 : i32
    %c0_i32_1 = arith.constant 0 : i32
    return %c0_i32, %c0_i32_0 : i32, i32
  }
  func.func @transform_6(%arg0: i32) -> (i32, i32) {
    %c0_i32 = arith.constant 0 : i32
    %c0_i32_0 = arith.constant 0 : i32
    %c0_i32_1 = arith.constant 0 : i32
    return %c0_i32, %c0_i32_0 : i32, i32
  }
  func.func @transform_7(%arg0: i32) -> (i32, i32) {
    %c0_i32 = arith.constant 0 : i32
    %c0_i32_0 = arith.constant 0 : i32
    return %arg0, %c0_i32 : i32, i32
  }
}

</mosaic_0001>

<llo_original>
// kernel: tpu_custom_call.1
$region0: #{tpu_custom_call.1}
  #allocation0 [shape = 'u32[]', space=smem, size = 0x4, offset = 0x4, fixed_abs, tag = 'smem constant byte address 0x4 - core index']
  #allocation1 [shape = 'u32[144,128]{1,0:T(1,128)}', space=vmem, size = 0x12000, scoped, tag = 'internal scratch']
  %s0 = inlined_call_operand.hbm [shape: f32[8,16], index: 0, kind: input, shape index: {}]
  %s1 = inlined_call_operand.vmem [shape: f32[16,32], index: 1, kind: input, shape index: {}]
  %s2 = inlined_call_operand.vmem [shape: f32[1,32], index: 2, kind: input, shape index: {}]
  %s3 = inlined_call_operand.vmem [shape: f32[32,32], index: 3, kind: input, shape index: {}]
  %s4 = inlined_call_operand.vmem [shape: f32[1,32], index: 4, kind: input, shape index: {}]
  %s5 = inlined_call_operand.vmem [shape: f32[32,8], index: 5, kind: input, shape index: {}]
  %s6 = inlined_call_operand.vmem [shape: f32[1,8], index: 6, kind: input, shape index: {}]
  %s7 = inlined_call_operand.hbm [shape: f32[8,8], index: 7, kind: output, shape index: {}]
  %s8 = sld [smem:[#allocation0]]
  $region42: #{tpu_custom_call.1} parent=0
    _
  %s10 = ssub.s32 1, %s8
  %s11 = scalar_select 0, %s10, %s8
  $region1: #{tpu_custom_call.1} parent=0
    #allocation2 [shape = 'u8[4096]{0}', space=vmem, size = 0x1000, scoped, tag = 'input window, operand 0, single buffered']
    #allocation3 [shape = 's32[1]{0}', space=sflag, size = 0x4, scoped, tag = 'scoped memory for tpu_custom_call.1']
    #allocation4 [shape = 's32[1]{0}', space=sflag, size = 0x4, scoped, tag = 'scoped memory for tpu_custom_call.1']
    #allocation5 [shape = 'u8[4096]{0}', space=vmem, size = 0x1000, scoped, tag = 'output window, operand 0, single buffered']
    %12 = vsyncpa [#allocation3], 0
    %13 = vsyncpa [#allocation4], 0
    // Predicated region
    $region2: #{tpu_custom_call.1} parent=1 // pred_check
      _
    $region3: #{tpu_custom_call.1} parent=1 // pred_check_branch
      %15 = sbr.rel (0) target = $region5
    $region4: #{tpu_custom_call.1} parent=1 // pred_region
      %s17 = ssub.s32 128, 128
      %18 = vsyncadd [#allocation3], %s17
      %s20 = sshll.u32 [#allocation2], 4
      %s21 = int_to_ptr.vmem [resolvable:$true] %s20
      %23 = dma.hbm_to_vmem [thread:$0]  %s0, 128, %s21, [#allocation3]
    $region5: #{tpu_custom_call.1} parent=1 // pred_fallthru
      _
    // Predicated region
    $region6: #{tpu_custom_call.1} parent=1 // pred_check
      _
    $region7: #{tpu_custom_call.1} parent=1 // pred_check_branch
      %25 = sbr.rel (0) target = $region9
    $region8: #{tpu_custom_call.1} parent=1 // pred_region
      _
    $region9: #{tpu_custom_call.1} parent=1 // pred_fallthru
      _
    // Predicated region
    $region10: #{tpu_custom_call.1} parent=1 // pred_check
      _
    $region11: #{tpu_custom_call.1} parent=1 // pred_check_branch
      %27 = sbr.rel (0) target = $region13
    $region12: #{tpu_custom_call.1} parent=1 // pred_region
      _
    $region13: #{tpu_custom_call.1} parent=1 // pred_fallthru
      _
    // Predicated region
    $region14: #{tpu_custom_call.1} parent=1 // pred_check
      _
    $region15: #{tpu_custom_call.1} parent=1 // pred_check_branch
      %29 = sbr.rel (0) target = $region17
    $region16: #{tpu_custom_call.1} parent=1 // pred_region
      _
    $region17: #{tpu_custom_call.1} parent=1 // pred_fallthru
      _
    // Predicated region
    $region18: #{tpu_custom_call.1} parent=1 // pred_check
      _
    $region19: #{tpu_custom_call.1} parent=1 // pred_check_branch
      %31 = sbr.rel (0) target = $region21
    $region20: #{tpu_custom_call.1} parent=1 // pred_region
      _
    $region21: #{tpu_custom_call.1} parent=1 // pred_fallthru
      _
    // Predicated region
    $region22: #{tpu_custom_call.1} parent=1 // pred_check
      _
    $region23: #{tpu_custom_call.1} parent=1 // pred_check_branch
      %33 = sbr.rel (0) target = $region25
    $region24: #{tpu_custom_call.1} parent=1 // pred_region
      _
    $region25: #{tpu_custom_call.1} parent=1 // pred_fallthru
      _
    // Predicated region
    $region26: #{tpu_custom_call.1} parent=1 // pred_check
      _
    $region27: #{tpu_custom_call.1} parent=1 // pred_check_branch
      %35 = sbr.rel (0) target = $region29
    $region28: #{tpu_custom_call.1} parent=1 // pred_region
      _
    $region29: #{tpu_custom_call.1} parent=1 // pred_fallthru
      _
    // Predicated region
    $region30: #{tpu_custom_call.1} parent=1 // pred_check
      _
    $region31: #{tpu_custom_call.1} parent=1 // pred_check_branch
      %37 = sbr.rel (0) target = $region33
    $region32: #{tpu_custom_call.1} parent=1 // pred_region
      %38 = dma.done [#allocation3], 128
    $region33: #{tpu_custom_call.1} parent=1 // pred_fallthru
      _
    %v39 = vld [vmem:[#allocation2] sm:$0xff]
    %v40 = vld [vmem:[%s1] sm:$0xff]
    %v41 = vld [vmem:[%s1 + $0x8] sm:$0xff]
    %v42 = vld [vmem:[%s2] sm:$0x1]
    %v44 = vlaneseq
    %v45 = vshrl.u32 %v44, 7
    %v46 = vsub.s32 0, %v45
    %v47 = vrot.slane %v42, %v46
    %vm49 = vcmask 130048
    %v51 = vsel %vm49, %v39, 0
    %53 = vmatprep.subr.mxu0 0.0
    %54 = vmatpush1.msra.mxu0 %v40
    %55 = vmatprep.subr.mxu0 0.0
    %56 = vmatpush1.msra.mxu0 %v41
    %57 = vmatprep.subr.mxu0 0.0
    %58 = vmatpush1.msra.mxu0 0.0
    %59 = vmatprep.subr.mxu0 0.0
    %60 = vmatpush1.msra.mxu0 0.0
    %61 = vmatprep.subr.mxu0 0.0
    %62 = vmatpush1.msra.mxu0 0.0
    %63 = vmatprep.subr.mxu0 0.0
    %64 = vmatpush1.msra.mxu0 0.0
    %65 = vmatprep.subr.mxu0 0.0
    %66 = vmatpush1.msra.mxu0 0.0
    %67 = vmatprep.subr.mxu0 0.0
    %68 = vmatpush1.msra.mxu0 0.0
    %69 = vmatprep.subr.mxu0 0.0
    %70 = vmatpush1.msra.mxu0 0.0
    %71 = vmatprep.subr.mxu0 0.0
    %72 = vmatpush1.msra.mxu0 0.0
    %73 = vmatprep.subr.mxu0 0.0
    %74 = vmatpush1.msra.mxu0 0.0
    %75 = vmatprep.subr.mxu0 0.0
    %76 = vmatpush1.msra.mxu0 0.0
    %77 = vmatprep.subr.mxu0 0.0
    %78 = vmatpush1.msra.mxu0 0.0
    %79 = vmatprep.subr.mxu0 0.0
    %80 = vmatpush1.msra.mxu0 0.0
    %81 = vmatprep.subr.mxu0 0.0
    %82 = vmatpush1.msra.mxu0 0.0
    %83 = vmatprep.subr.mxu0 0.0
    %84 = vmatpush1.msra.mxu0 0.0
    %85 = vmatprep.subr.mxu0 0.0
    %86 = vmatpush1.msra.mxu0 0.0
    %87 = vmatprep.subr.mxu0 0.0
    %88 = vmatpush1.msra.mxu0 0.0
    %89 = vmatprep.subr.mxu0 0.0
    %90 = vmatpush1.msra.mxu0 0.0
    %91 = vmatprep.subr.mxu0 0.0
    %92 = vmatpush1.msra.mxu0 0.0
    %93 = vmatprep.subr.mxu0 0.0
    %94 = vmatpush1.msra.mxu0 0.0
    %95 = vmatprep.subr.mxu0 0.0
    %96 = vmatpush1.msra.mxu0 0.0
    %97 = vmatprep.subr.mxu0 0.0
    %98 = vmatpush1.msra.mxu0 0.0
    %99 = vmatprep.subr.mxu0 0.0
    %100 = vmatpush1.msra.mxu0 0.0
    %101 = vmatprep.subr.mxu0 0.0
    %102 = vmatpush1.msra.mxu0 0.0
    %103 = vmatprep.subr.mxu0 0.0
    %104 = vmatpush1.msra.mxu0 0.0
    %105 = vmatprep.subr.mxu0 0.0
    %106 = vmatpush1.msra.mxu0 0.0
    %107 = vmatprep.subr.mxu0 0.0
    %108 = vmatpush1.msra.mxu0 0.0
    %109 = vmatprep.subr.mxu0 0.0
    %110 = vmatpush1.msra.mxu0 0.0
    %111 = vmatprep.subr.mxu0 0.0
    %112 = vmatpush1.msra.mxu0 0.0
    %113 = vmatprep.subr.mxu0 0.0
    %114 = vmatpush1.msra.mxu0 0.0
    %115 = vmatprep.subr.mxu0 0.0
    %116 = vmatpush1.msra.mxu0 0.0
    %117 = vmatprep.mubr.f32.mxu0 0.0
    %118 = vmatmul.mubr.f32.gmra.mrb[0].mxu0 %v51
    %v119 = vpop.f32.mrb[0].mxu0
    %v120 = vadd.f32 %v47, %v119
    %v121 = vpop.f32.mrb[0].mxu0
    %122 = vdwg.mxu0
    %v123 = vmax.f32 %v120, 0.0
    %v124 = vld [vmem:[%s3] sm:$0xff]
    %v125 = vld [vmem:[%s3 + $0x8] sm:$0xff]
    %v126 = vld [vmem:[%s3 + $0x10] sm:$0xff]
    %v127 = vld [vmem:[%s3 + $0x18] sm:$0xff]
    %v128 = vld [vmem:[%s4] sm:$0x1]
    %v130 = vlaneseq
    %v131 = vshrl.u32 %v130, 7
    %v132 = vsub.s32 0, %v131
    %v133 = vrot.slane %v128, %v132
    %vm135 = vcmask 261120
    %v137 = vsel %vm135, %v123, 0
    %139 = vmatprep.subr.mxu0 0.0
    %140 = vmatpush1.msra.mxu0 %v124
    %141 = vmatprep.subr.mxu0 0.0
    %142 = vmatpush1.msra.mxu0 %v125
    %143 = vmatprep.subr.mxu0 0.0
    %144 = vmatpush1.msra.mxu0 %v126
    %145 = vmatprep.subr.mxu0 0.0
    %146 = vmatpush1.msra.mxu0 %v127
    %147 = vmatprep.subr.mxu0 0.0
    %148 = vmatpush1.msra.mxu0 0.0
    %149 = vmatprep.subr.mxu0 0.0
    %150 = vmatpush1.msra.mxu0 0.0
    %151 = vmatprep.subr.mxu0 0.0
    %152 = vmatpush1.msra.mxu0 0.0
    %153 = vmatprep.subr.mxu0 0.0
    %154 = vmatpush1.msra.mxu0 0.0
    %155 = vmatprep.subr.mxu0 0.0
    %156 = vmatpush1.msra.mxu0 0.0
    %157 = vmatprep.subr.mxu0 0.0
    %158 = vmatpush1.msra.mxu0 0.0
    %159 = vmatprep.subr.mxu0 0.0
    %160 = vmatpush1.msra.mxu0 0.0
    %161 = vmatprep.subr.mxu0 0.0
    %162 = vmatpush1.msra.mxu0 0.0
    %163 = vmatprep.subr.mxu0 0.0
    %164 = vmatpush1.msra.mxu0 0.0
    %165 = vmatprep.subr.mxu0 0.0
    %166 = vmatpush1.msra.mxu0 0.0
    %167 = vmatprep.subr.mxu0 0.0
    %168 = vmatpush1.msra.mxu0 0.0
    %169 = vmatprep.subr.mxu0 0.0
    %170 = vmatpush1.msra.mxu0 0.0
    %171 = vmatprep.subr.mxu0 0.0
    %172 = vmatpush1.msra.mxu0 0.0
    %173 = vmatprep.subr.mxu0 0.0
    %174 = vmatpush1.msra.mxu0 0.0
    %175 = vmatprep.subr.mxu0 0.0
    %176 = vmatpush1.msra.mxu0 0.0
    %177 = vmatprep.subr.mxu0 0.0
    %178 = vmatpush1.msra.mxu0 0.0
    %179 = vmatprep.subr.mxu0 0.0
    %180 = vmatpush1.msra.mxu0 0.0
    %181 = vmatprep.subr.mxu0 0.0
    %182 = vmatpush1.msra.mxu0 0.0
    %183 = vmatprep.subr.mxu0 0.0
    %184 = vmatpush1.msra.mxu0 0.0
    %185 = vmatprep.subr.mxu0 0.0
    %186 = vmatpush1.msra.mxu0 0.0
    %187 = vmatprep.subr.mxu0 0.0
    %188 = vmatpush1.msra.mxu0 0.0
    %189 = vmatprep.subr.mxu0 0.0
    %190 = vmatpush1.msra.mxu0 0.0
    %191 = vmatprep.subr.mxu0 0.0
    %192 = vmatpush1.msra.mxu0 0.0
    %193 = vmatprep.subr.mxu0 0.0
    %194 = vmatpush1.msra.mxu0 0.0
    %195 = vmatprep.subr.mxu0 0.0
    %196 = vmatpush1.msra.mxu0 0.0
    %197 = vmatprep.subr.mxu0 0.0
    %198 = vmatpush1.msra.mxu0 0.0
    %199 = vmatprep.subr.mxu0 0.0
    %200 = vmatpush1.msra.mxu0 0.0
    %201 = vmatprep.subr.mxu0 0.0
    %202 = vmatpush1.msra.mxu0 0.0
    %203 = vmatprep.mubr.f32.mxu0 0.0
    %204 = vmatmul.mubr.f32.gmra.mrb[0].mxu0 %v137
    %v205 = vpop.f32.mrb[0].mxu0
    %v206 = vadd.f32 %v133, %v205
    %v207 = vpop.f32.mrb[0].mxu0
    %208 = vdwg.mxu0
    %v209 = vmax.f32 %v206, 0.0
    %v210 = vld [vmem:[%s5] sm:$0xff]
    %v211 = vld [vmem:[%s5 + $0x8] sm:$0xff]
    %v212 = vld [vmem:[%s5 + $0x10] sm:$0xff]
    %v213 = vld [vmem:[%s5 + $0x18] sm:$0xff]
    %v214 = vld [vmem:[%s6] sm:$0x1]
    %v216 = vlaneseq
    %v217 = vshrl.u32 %v216, 7
    %v218 = vsub.s32 0, %v217
    %v219 = vrot.slane %v214, %v218
    %v222 = vsel %vm135, %v209, 0
    %224 = vmatprep.subr.mxu0 0.0
    %225 = vmatpush1.msra.mxu0 %v210
    %226 = vmatprep.subr.mxu0 0.0
    %227 = vmatpush1.msra.mxu0 %v211
    %228 = vmatprep.subr.mxu0 0.0
    %229 = vmatpush1.msra.mxu0 %v212
    %230 = vmatprep.subr.mxu0 0.0
    %231 = vmatpush1.msra.mxu0 %v213
    %232 = vmatprep.subr.mxu0 0.0
    %233 = vmatpush1.msra.mxu0 0.0
    %234 = vmatprep.subr.mxu0 0.0
    %235 = vmatpush1.msra.mxu0 0.0
    %236 = vmatprep.subr.mxu0 0.0
    %237 = vmatpush1.msra.mxu0 0.0
    %238 = vmatprep.subr.mxu0 0.0
    %239 = vmatpush1.msra.mxu0 0.0
    %240 = vmatprep.subr.mxu0 0.0
    %241 = vmatpush1.msra.mxu0 0.0
    %242 = vmatprep.subr.mxu0 0.0
    %243 = vmatpush1.msra.mxu0 0.0
    %244 = vmatprep.subr.mxu0 0.0
    %245 = vmatpush1.msra.mxu0 0.0
    %246 = vmatprep.subr.mxu0 0.0
    %247 = vmatpush1.msra.mxu0 0.0
    %248 = vmatprep.subr.mxu0 0.0
    %249 = vmatpush1.msra.mxu0 0.0
    %250 = vmatprep.subr.mxu0 0.0
    %251 = vmatpush1.msra.mxu0 0.0
    %252 = vmatprep.subr.mxu0 0.0
    %253 = vmatpush1.msra.mxu0 0.0
    %254 = vmatprep.subr.mxu0 0.0
    %255 = vmatpush1.msra.mxu0 0.0
    %256 = vmatprep.subr.mxu0 0.0
    %257 = vmatpush1.msra.mxu0 0.0
    %258 = vmatprep.subr.mxu0 0.0
    %259 = vmatpush1.msra.mxu0 0.0
    %260 = vmatprep.subr.mxu0 0.0
    %261 = vmatpush1.msra.mxu0 0.0
    %262 = vmatprep.subr.mxu0 0.0
    %263 = vmatpush1.msra.mxu0 0.0
    %264 = vmatprep.subr.mxu0 0.0
    %265 = vmatpush1.msra.mxu0 0.0
    %266 = vmatprep.subr.mxu0 0.0
    %267 = vmatpush1.msra.mxu0 0.0
    %268 = vmatprep.subr.mxu0 0.0
    %269 = vmatpush1.msra.mxu0 0.0
    %270 = vmatprep.subr.mxu0 0.0
    %271 = vmatpush1.msra.mxu0 0.0
    %272 = vmatprep.subr.mxu0 0.0
    %273 = vmatpush1.msra.mxu0 0.0
    %274 = vmatprep.subr.mxu0 0.0
    %275 = vmatpush1.msra.mxu0 0.0
    %276 = vmatprep.subr.mxu0 0.0
    %277 = vmatpush1.msra.mxu0 0.0
    %278 = vmatprep.subr.mxu0 0.0
    %279 = vmatpush1.msra.mxu0 0.0
    %280 = vmatprep.subr.mxu0 0.0
    %281 = vmatpush1.msra.mxu0 0.0
    %282 = vmatprep.subr.mxu0 0.0
    %283 = vmatpush1.msra.mxu0 0.0
    %284 = vmatprep.subr.mxu0 0.0
    %285 = vmatpush1.msra.mxu0 0.0
    %286 = vmatprep.subr.mxu0 0.0
    %287 = vmatpush1.msra.mxu0 0.0
    %288 = vmatprep.mubr.f32.mxu0 0.0
    %289 = vmatmul.mubr.f32.gmra.mrb[0].mxu0 %v222
    %v290 = vpop.f32.mrb[0].mxu0
    %v291 = vadd.f32 %v219, %v290
    %v292 = vpop.f32.mrb[0].mxu0
    %293 = vdwg.mxu0
    %v294 = vtanh.pop %v291
    %vm295 = vcmask 64512
    %296 = vst.msk [vmem:[#allocation5] sm:$0xff] %vm295, %v294
    // Predicated region
    $region34: #{tpu_custom_call.1} parent=1 // pred_check
      _
    $region35: #{tpu_custom_call.1} parent=1 // pred_check_branch
      %298 = sbr.rel (0) target = $region37
    $region36: #{tpu_custom_call.1} parent=1 // pred_region
      %s300 = ssub.s32 128, 128
      %301 = vsyncadd [#allocation4], %s300
      %s303 = sshll.u32 [#allocation5], 4
      %s304 = int_to_ptr.vmem [resolvable:$true] %s303
      %306 = dma.vmem_to_hbm [thread:$0]  %s304, 128, %s7, [#allocation4]
    $region37: #{tpu_custom_call.1} parent=1 // pred_fallthru
      _
    // Predicated region
    $region38: #{tpu_custom_call.1} parent=1 // pred_check
      _
    $region39: #{tpu_custom_call.1} parent=1 // pred_check_branch
      %308 = sbr.rel (0) target = $region41
    $region40: #{tpu_custom_call.1} parent=1 // pred_region
      %309 = dma.done [#allocation4], 128
    $region41: #{tpu_custom_call.1} parent=1 // pred_fallthru
      _
    %310 = vsyncpa [#allocation3], 1
    %311 = vsyncpa [#allocation4], 1

</llo_original>
